<compile_context>
chip_gen: v7x
topology: tpu7x:2x2x1
jax: 0.10.0
libtpu: 0.0.40
codegen_flags: <defaults>
</compile_context>

<pallas_src>
import jax
import jax.numpy as jnp
from jax.experimental import pallas as pl
from jax.experimental.pallas import tpu as pltpu


def _rprelu_kernel(x_ref, params_ref, o_ref):
    # x_ref block: (block_rows, block_cols)
    # params_ref block: (block_rows, 3) -> columns are [gamma, beta1, beta2]
    x = x_ref[...]
    g = params_ref[:, 0:1]
    b1 = params_ref[:, 1:2]
    b2 = params_ref[:, 2:3]
    xb = x + b1
    o_ref[...] = jnp.where(xb > 0, xb, xb * g) + b2


def _pick_block(dim, target, align):
    """Pick a block size for one axis.

    - If the axis fits in `target`, use the full extent (always legal).
    - Otherwise prefer the largest multiple of `align` <= target that divides
      `dim` exactly (no masked edge block).
    - If no divisor exists, fall back to an aligned block; the caller uses a
      cdiv grid and Pallas masks the partial edge block.
    """
    if dim <= target:
        return dim
    b = max((target // align) * align, align)
    for cand in range(b, align - 1, -align):
        if dim % cand == 0:
            return cand
    return b


def rprelu(x, gamma, beta1, beta2):
    """x: (N, C, H, W); gamma/beta1/beta2: (1, C, 1, 1). Matches PyTorch RPReLU."""
    N, C, H, W = x.shape
    rows, cols = N * C, H * W

    # Lane-dense 2D view: row = (n, c) pair, column = flattened spatial (H*W).
    x2 = x.reshape(rows, cols)

    # Per-row parameter table (row i corresponds to channel i % C).
    def per_row(p):
        return jnp.broadcast_to(p.reshape(1, C), (N, C)).reshape(rows, 1)

    params = jnp.concatenate(
        [per_row(gamma), per_row(beta1), per_row(beta2)], axis=1
    ).astype(x.dtype)  # (rows, 3)

    # ~4 MiB f32 blocks; in+out double-buffered stays well under the default
    # scoped VMEM limit on every generation (v5e/v6e/v7x).
    block_rows = _pick_block(rows, 512, 8)
    block_cols = _pick_block(cols, 2048, 128)
    grid = (pl.cdiv(rows, block_rows), pl.cdiv(cols, block_cols))

    out2 = pl.pallas_call(
        _rprelu_kernel,
        out_shape=jax.ShapeDtypeStruct((rows, cols), x.dtype),
        grid_spec=pltpu.PrefetchScalarGridSpec(
            num_scalar_prefetch=0,
            grid=grid,
            in_specs=[
                pl.BlockSpec((block_rows, block_cols), lambda i, j: (i, j)),
                # Params depend only on the row index -> resident across cols.
                pl.BlockSpec((block_rows, 3), lambda i, j: (i, 0)),
            ],
            out_specs=pl.BlockSpec((block_rows, block_cols), lambda i, j: (i, j)),
        ),
        compiler_params=pltpu.CompilerParams(
            dimension_semantics=("parallel", "parallel"),
            vmem_limit_bytes=48 * 1024 * 1024,
        ),
    )(x2, params)

    return out2.reshape(N, C, H, W)


if __name__ == "__main__":
    key = jax.random.PRNGKey(0)
    N, C, H, W = 2, 4, 16, 16
    init = 0.25

    x = jax.random.normal(key, (N, C, H, W), dtype=jnp.float32)

    # Parameter init mirroring the PyTorch module (gamma = init, betas = 0),
    # perturbed deterministically so every term of the forward is exercised.
    kg, k1, k2 = jax.random.split(jax.random.PRNGKey(1), 3)
    gamma = jnp.ones((1, C, 1, 1), jnp.float32) * init \
        + 0.01 * jax.random.normal(kg, (1, C, 1, 1), dtype=jnp.float32)
    beta1 = 0.1 * jax.random.normal(k1, (1, C, 1, 1), dtype=jnp.float32)
    beta2 = 0.1 * jax.random.normal(k2, (1, C, 1, 1), dtype=jnp.float32)

    out = rprelu(x, gamma, beta1, beta2)
    jax.block_until_ready(out)

    # Pure-JAX reference (exactly the PyTorch forward semantics).
    xb = x + beta1
    ref = jnp.where(xb > 0, xb + beta2, xb * gamma + beta2)
    assert jnp.allclose(out, ref, atol=1e-6, rtol=1e-6)

    print("KERNEL_OK")
</pallas_src>

<mosaic_0001>
module attributes {stable_mosaic.version = 11 : i64} {
  func.func @_rprelu_kernel(%arg0: i32, %arg1: i32, %arg2: memref<8x256xf32, #tpu.memory_space<vmem>>, %arg3: memref<8x3xf32, #tpu.memory_space<vmem>>, %arg4: memref<8x256xf32, #tpu.memory_space<vmem>>) attributes {dimension_semantics = [#tpu.dimension_semantics<parallel>, #tpu.dimension_semantics<parallel>], iteration_bounds = array<i64: 1, 1>, scalar_prefetch = 0 : i64, scratch_operands = 0 : i64, tpu.core_type = #tpu.core_type<tc>, window_params = [{transform_indices = @transform_0, window_bounds = array<i64: 8, 256>}, {transform_indices = @transform_1, window_bounds = array<i64: 8, 3>}, {transform_indices = @transform_2, window_bounds = array<i64: 8, 256>}]} {
    %c0 = arith.constant 0 : index
    %c0_0 = arith.constant 0 : index
    %0 = vector.load %arg2[%c0, %c0_0] : memref<8x256xf32, #tpu.memory_space<vmem>>, vector<8x256xf32>
    %c0_1 = arith.constant 0 : index
    %c0_2 = arith.constant 0 : index
    %1 = vector.load %arg3[%c0_1, %c0_2] : memref<8x3xf32, #tpu.memory_space<vmem>>, vector<8x1xf32>
    %c0_3 = arith.constant 0 : index
    %c1 = arith.constant 1 : index
    %2 = vector.load %arg3[%c0_3, %c1] : memref<8x3xf32, #tpu.memory_space<vmem>>, vector<8x1xf32>
    %c0_4 = arith.constant 0 : index
    %c2 = arith.constant 2 : index
    %3 = vector.load %arg3[%c0_4, %c2] : memref<8x3xf32, #tpu.memory_space<vmem>>, vector<8x1xf32>
    %4 = vector.broadcast %2 : vector<8x1xf32> to vector<8x256xf32>
    %5 = arith.addf %0, %4 : vector<8x256xf32>
    %cst = arith.constant 0.000000e+00 : f32
    %6 = vector.broadcast %cst : f32 to vector<8x256xf32>
    %7 = arith.cmpf ogt, %5, %6 : vector<8x256xf32>
    %8 = vector.broadcast %1 : vector<8x1xf32> to vector<8x256xf32>
    %9 = arith.mulf %5, %8 : vector<8x256xf32>
    %10 = arith.select %7, %5, %9 : vector<8x256xi1>, vector<8x256xf32>
    %11 = vector.broadcast %3 : vector<8x1xf32> to vector<8x256xf32>
    %12 = arith.addf %10, %11 : vector<8x256xf32>
    %c0_5 = arith.constant 0 : index
    %c0_6 = arith.constant 0 : index
    %13 = vector.load %arg4[%c0_5, %c0_6] : memref<8x256xf32, #tpu.memory_space<vmem>>, vector<8x256xf32>
    tpu.vector_store %arg4[%c0_5, %c0_6], %12 {strides = array<i32>} : memref<8x256xf32, #tpu.memory_space<vmem>>, vector<8x256xf32>,
    return
  }
  func.func @transform_0(%arg0: i32, %arg1: i32) -> (i32, i32) {
    %c0_i32 = arith.constant 0 : i32
    return %arg0, %arg1 : i32, i32
  }
  func.func @transform_1(%arg0: i32, %arg1: i32) -> (i32, i32) {
    %c0_i32 = arith.constant 0 : i32
    %c0_i32_0 = arith.constant 0 : i32
    return %arg0, %c0_i32 : i32, i32
  }
  func.func @transform_2(%arg0: i32, %arg1: i32) -> (i32, i32) {
    %c0_i32 = arith.constant 0 : i32
    return %arg0, %arg1 : i32, i32
  }
}

</mosaic_0001>

<llo_original>
// kernel: tpu_custom_call.1
$region0: #{tpu_custom_call.1}
  #allocation0 [shape = 'u32[]', space=smem, size = 0x4, offset = 0x4, fixed_abs, tag = 'smem constant byte address 0x4 - core index']
  #allocation1 [shape = 'u32[144,128]{1,0:T(1,128)}', space=vmem, size = 0x12000, scoped, tag = 'internal scratch']
  %s0 = inlined_call_operand.hbm [shape: f32[8,256], index: 0, kind: input, shape index: {}]
  %s1 = inlined_call_operand.vmem [shape: f32[8,3], index: 1, kind: input, shape index: {}]
  %s2 = inlined_call_operand.hbm [shape: f32[8,256], index: 2, kind: output, shape index: {}]
  %s3 = sld [smem:[#allocation0]]
  $region22: #{tpu_custom_call.1} parent=0
    _
  %s5 = ssub.s32 1, %s3
  %s6 = scalar_select 0, %s5, %s3
  $region1: #{tpu_custom_call.1} parent=0
    #allocation2 [shape = 'u8[8192]{0}', space=vmem, size = 0x2000, scoped, tag = 'input window, operand 0, single buffered']
    #allocation3 [shape = 's32[1]{0}', space=sflag, size = 0x4, scoped, tag = 'scoped memory for tpu_custom_call.1']
    #allocation4 [shape = 's32[1]{0}', space=sflag, size = 0x4, scoped, tag = 'scoped memory for tpu_custom_call.1']
    #allocation5 [shape = 'u8[8192]{0}', space=vmem, size = 0x2000, scoped, tag = 'output window, operand 0, single buffered']
    %7 = vsyncpa [#allocation3], 0
    %8 = vsyncpa [#allocation4], 0
    // Predicated region
    $region2: #{tpu_custom_call.1} parent=1 // pred_check
      _
    $region3: #{tpu_custom_call.1} parent=1 // pred_check_branch
      %10 = sbr.rel (0) target = $region5
    $region4: #{tpu_custom_call.1} parent=1 // pred_region
      %s12 = ssub.s32 256, 256
      %13 = vsyncadd [#allocation3], %s12
      %s15 = sshll.u32 [#allocation2], 4
      %s16 = int_to_ptr.vmem [resolvable:$true] %s15
      %18 = dma.hbm_to_vmem [thread:$0]  %s0, 256, %s16, [#allocation3]
    $region5: #{tpu_custom_call.1} parent=1 // pred_fallthru
      _
    // Predicated region
    $region6: #{tpu_custom_call.1} parent=1 // pred_check
      _
    $region7: #{tpu_custom_call.1} parent=1 // pred_check_branch
      %20 = sbr.rel (0) target = $region9
    $region8: #{tpu_custom_call.1} parent=1 // pred_region
      _
    $region9: #{tpu_custom_call.1} parent=1 // pred_fallthru
      _
    // Predicated region
    $region10: #{tpu_custom_call.1} parent=1 // pred_check
      _
    $region11: #{tpu_custom_call.1} parent=1 // pred_check_branch
      %22 = sbr.rel (0) target = $region13
    $region12: #{tpu_custom_call.1} parent=1 // pred_region
      %23 = dma.done [#allocation3], 256
    $region13: #{tpu_custom_call.1} parent=1 // pred_fallthru
      _
    %v24 = vld [vmem:[#allocation2] sm:$0xff]
    %v25 = vld [vmem:[#allocation2 + $0x8] sm:$0xff]
    %v26 = vld [vmem:[%s1] sm:$0xff]
    %28 = vset.pattern.permute.xlu0 1
    %29 = vperm.xlu0 %28, %v26
    %v30 = vpop.permute.xlu0 %29
    %v32 = vadd.f32 %v24, %v30
    %v33 = vadd.f32 %v25, %v30
    %vm34 = vcmp.gt.f32.partialorder %v32, 0.0
    %vm35 = vcmp.gt.f32.partialorder %v33, 0.0
    %36 = vset.pattern.permute.xlu0 0
    %37 = vperm.xlu0 %36, %v26
    %v38 = vpop.permute.xlu0 %37
    %v40 = vmul.f32 %v32, %v38
    %v41 = vmul.f32 %v33, %v38
    %v42 = vsel %vm34, %v32, %v40
    %v43 = vsel %vm35, %v33, %v41
    %44 = vset.pattern.permute.xlu0 2
    %45 = vperm.xlu0 %44, %v26
    %v46 = vpop.permute.xlu0 %45
    %v48 = vadd.f32 %v42, %v46
    %v49 = vadd.f32 %v43, %v46
    %50 = vst [vmem:[#allocation5] sm:$0xff] %v48
    %51 = vst [vmem:[#allocation5 + $0x8] sm:$0xff] %v49
    // Predicated region
    $region14: #{tpu_custom_call.1} parent=1 // pred_check
      _
    $region15: #{tpu_custom_call.1} parent=1 // pred_check_branch
      %53 = sbr.rel (0) target = $region17
    $region16: #{tpu_custom_call.1} parent=1 // pred_region
      %s55 = ssub.s32 256, 256
      %56 = vsyncadd [#allocation4], %s55
      %s58 = sshll.u32 [#allocation5], 4
      %s59 = int_to_ptr.vmem [resolvable:$true] %s58
      %61 = dma.vmem_to_hbm [thread:$0]  %s59, 256, %s2, [#allocation4]
    $region17: #{tpu_custom_call.1} parent=1 // pred_fallthru
      _
    // Predicated region
    $region18: #{tpu_custom_call.1} parent=1 // pred_check
      _
    $region19: #{tpu_custom_call.1} parent=1 // pred_check_branch
      %63 = sbr.rel (0) target = $region21
    $region20: #{tpu_custom_call.1} parent=1 // pred_region
      %64 = dma.done [#allocation4], 256
    $region21: #{tpu_custom_call.1} parent=1 // pred_fallthru
      _
    %65 = vsyncpa [#allocation3], 1
    %66 = vsyncpa [#allocation4], 1

</llo_original>
